<compile_context>
chip_gen: v6e
topology: v6e:2x2x1
jax: 0.10.0
libtpu: 0.0.40
codegen_flags: <defaults>
</compile_context>

<pallas_src>
import functools
from math import ceil

import jax
import jax.numpy as jnp
from jax import lax
from jax.experimental import pallas as pl
from jax.experimental.pallas import tpu as pltpu  # noqa: F401  (TPU backend assumed)

HPAD = 128   # packed hidden lane width (2*H + L_in + 1 = 93 <= 128)
LPAD = 128   # output lane width (output_len = 12 -> padded to 128 lanes)


# ----------------------------------------------------------------------------
# Fused Pallas kernel: both heads + hidden stack + residual conv + all biases
# ----------------------------------------------------------------------------
def _fused_kernel(x_ref, w_in_ref, w_hid_ref, w_out_ref, o_ref,
                  *, num_layer, relu_lanes):
    # x_ref:     (BN, KPAD)        bf16  [patch | down | emb | 1 | 0-pad]
    # w_in_ref:  (KPAD, HPAD)      bf16  packed input weight (+bias row,
    #                                    +identity rows for residual carry)
    # w_hid_ref: (NL, HPAD, HPAD)  bf16  block-diagonal hidden weights
    # w_out_ref: (HPAD, LPAD)      bf16  packed output weight (+res conv +bias)
    # o_ref:     (BN, LPAD)        f32   lane-dense output
    z = jnp.dot(x_ref[...], w_in_ref[...], preferred_element_type=jnp.float32)
    lane = lax.broadcasted_iota(jnp.int32, z.shape, 1)
    # ReLU only on the two heads' hidden lanes; residual-carry / ones lanes
    # pass through untouched.
    h = jnp.where(lane < relu_lanes, jnp.maximum(z, 0.0), z)        # (BN, HPAD) f32

    for i in range(num_layer):                   # static unroll (num_layer small)
        zi = jnp.dot(h.astype(jnp.bfloat16), w_hid_ref[i],
                     preferred_element_type=jnp.float32)
        # carry columns of w_hid are zero -> relu(0)=0 -> carry lanes unchanged
        h = h + jnp.maximum(zi, 0.0)

    o_ref[...] = jnp.dot(h.astype(jnp.bfloat16), w_out_ref[...],
                         preferred_element_type=jnp.float32)


# ----------------------------------------------------------------------------
# Parameter construction (deterministic, xavier-uniform-style), pre-packed
# ----------------------------------------------------------------------------
def _xavier(key, shape):
    fan_in, fan_out = shape[-2], shape[-1]
    limit = (6.0 / (fan_in + fan_out)) ** 0.5
    return jax.random.uniform(key, shape, jnp.float32, -limit, limit)


def init_params(key, cfg):
    keys = iter(jax.random.split(key, 32))
    H = cfg["d_d"] + cfg["d_td"] + cfg["d_dw"] + cfg["d_spa"]        # 40
    S = cfg["input_len"] * cfg["input_dim"]                          # 12
    E = cfg["d_td"] + cfg["d_dw"] + cfg["d_spa"]                     # 24
    NL = cfg["num_layer"]
    Lo = cfg["output_len"]
    Li = cfg["input_len"]

    res_off = 2 * H            # residual series carry lanes [res_off, res_off+Li)
    one_off = res_off + Li     # constant-1 lane (bias carrier)
    assert one_off + 1 <= HPAD, "packed hidden layout does not fit 128 lanes"
    assert Lo <= LPAD

    K = 2 * S + E + 1                                   # patch + down + emb + ones
    KPAD = ((K + 15) // 16) * 16                        # bf16 sublane-tile aligned

    def head():
        return (_xavier(next(keys), (S, H)),            # series -> hidden
                _xavier(next(keys), (E, H)),            # embedding -> hidden
                _xavier(next(keys), (NL, H, H)),        # hidden residual layers
                _xavier(next(keys), (H, Lo)))           # hidden -> output
    ws0, we0, wh0, wo0 = head()                         # patch encoder
    ws1, we1, wh1, wo1 = head()                         # downsample encoder
    w_res = _xavier(next(keys), (Lo, Li))               # 1x1 conv weight (Lo, Li)
    b_in = jnp.zeros((2, H), jnp.float32)
    b_hid = jnp.zeros((2, NL, H), jnp.float32)
    b_out = jnp.zeros((2, Lo), jnp.float32)
    b_res = jnp.zeros((Lo,), jnp.float32)

    # ---- packed input weight (KPAD, HPAD): one K=KPAD matmul does everything
    w_in = jnp.zeros((KPAD, HPAD), jnp.float32)
    w_in = w_in.at[0:S, 0:H].set(ws0)                           # patch series -> head0
    w_in = w_in.at[S:2 * S, H:2 * H].set(ws1)                   # down  series -> head1
    w_in = w_in.at[2 * S:2 * S + E, 0:H].set(we0)               # shared emb  -> head0
    w_in = w_in.at[2 * S:2 * S + E, H:2 * H].set(we1)           # shared emb  -> head1
    w_in = w_in.at[2 * S + E, 0:H].set(b_in[0])                 # biases via ones lane
    w_in = w_in.at[2 * S + E, H:2 * H].set(b_in[1])
    w_in = w_in.at[2 * S + E, one_off].set(1.0)                 # propagate the 1
    # residual carry: identity from the time-ordered series (input_dim == 1)
    w_in = w_in.at[jnp.arange(Li), res_off + jnp.arange(Li)].set(1.0)

    # ---- packed block-diagonal hidden weights (NL, HPAD, HPAD)
    w_hid = jnp.zeros((NL, HPAD, HPAD), jnp.float32)
    w_hid = w_hid.at[:, 0:H, 0:H].set(wh0)
    w_hid = w_hid.at[:, H:2 * H, H:2 * H].set(wh1)
    w_hid = w_hid.at[:, one_off, 0:H].set(b_hid[0])
    w_hid = w_hid.at[:, one_off, H:2 * H].set(b_hid[1])

    # ---- packed output weight (HPAD, LPAD): heads + residual conv + all biases
    w_out = jnp.zeros((HPAD, LPAD), jnp.float32)
    w_out = w_out.at[0:H, 0:Lo].set(wo0)
    w_out = w_out.at[H:2 * H, 0:Lo].set(wo1)
    w_out = w_out.at[res_off:res_off + Li, 0:Lo].set(w_res.T)
    w_out = w_out.at[one_off, 0:Lo].set(b_out[0] + b_out[1] + b_res)

    return {
        # codebooks (f32; gathers happen in the XLA wrapper)
        "td_codebook": _xavier(next(keys), (cfg["td_size"], cfg["d_td"])),
        "dw_codebook": _xavier(next(keys), (cfg["dw_size"], cfg["d_dw"])),
        "spa_codebook": _xavier(next(keys), (cfg["node_size"], cfg["d_spa"])),
        # fused-kernel weights (bf16 for the MXU; zero pads keep numerics exact)
        "w_in": w_in.astype(jnp.bfloat16),
        "w_hid": w_hid.astype(jnp.bfloat16),
        "w_out": w_out.astype(jnp.bfloat16),
    }


# ----------------------------------------------------------------------------
# Forward (feature plumbing in JAX, all matmuls/ReLUs/sums in one Pallas call)
# ----------------------------------------------------------------------------
def multiscale_mlp_forward(params, history_data, cfg):
    B, L, N, _ = history_data.shape
    C = cfg["input_dim"]
    stride, patch_len = cfg["stride"], cfg["patch_len"]
    input_len, output_len = cfg["input_len"], cfg["output_len"]
    H = cfg["d_d"] + cfg["d_td"] + cfg["d_dw"] + cfg["d_spa"]
    assert C == 1                                   # see TODO(synk) at top of file
    # reference only pads when in_len_add == 0 (a no-op); require divisibility.
    in_len_add = ceil(1.0 * input_len / stride) * stride - input_len
    assert in_len_add == 0 and input_len % patch_len == 0
    # the plain time-axis reshape used for the patch view relies on the
    # reference unfold having step == patch_len (non-overlapping); it does.

    input_data = history_data[..., :C]                                  # [B, L, N, 1]

    # time-ordered per-node series == exact patch-view flatten (step == patch_len)
    series_t = jnp.transpose(input_data, (0, 2, 1, 3)).reshape(B * N, L * C)
    # downsample view via a single reshape + transpose (no strided-slice loop)
    down = input_data.reshape(B, L // stride, stride, N, C)
    down_series = jnp.transpose(down, (0, 3, 2, 1, 4)).reshape(B * N, L * C)

    # STID-style codebook embeddings from the auxiliary channels (shared by heads)
    td_idx = jnp.clip((history_data[:, -1, :, 1] * cfg["td_size"]).astype(jnp.int32),
                      0, cfg["td_size"] - 1)                            # [B, N]
    dw_idx = jnp.clip(history_data[:, -1, :, 2].astype(jnp.int32),
                      0, cfg["dw_size"] - 1)                            # [B, N]
    td_emb = params["td_codebook"][td_idx]
    dw_emb = params["dw_codebook"][dw_idx]
    spa_emb = jnp.broadcast_to(params["spa_codebook"][None], (B, N, cfg["d_spa"]))
    emb = jnp.concatenate([td_emb, dw_emb, spa_emb], axis=-1).reshape(B * N, -1)

    # single fused LHS: [patch | down | emb | 1 | 0-pad]  ->  (BN, KPAD) bf16
    KPAD = params["w_in"].shape[0]
    ones = jnp.ones((B * N, 1), jnp.float32)
    x = jnp.concatenate([series_t, down_series, emb, ones], axis=-1)
    K = x.shape[1]
    assert K <= KPAD
    x = jnp.pad(x, ((0, 0), (0, KPAD - K))).astype(jnp.bfloat16)

    # ONE un-gridded Pallas call: both heads, hidden stack, residual, biases.
    out = pl.pallas_call(
        functools.partial(_fused_kernel,
                          num_layer=cfg["num_layer"], relu_lanes=2 * H),
        out_shape=jax.ShapeDtypeStruct((B * N, LPAD), jnp.float32),
    )(x, params["w_in"], params["w_hid"], params["w_out"])

    out = out[:, :output_len].reshape(B, N, output_len)                 # strip lane pad
    return jnp.transpose(out, (0, 2, 1))[..., None]                     # [B, L_out, N, 1]


# ----------------------------------------------------------------------------
if __name__ == "__main__":
    cfg = dict(
        node_size=16, input_len=12, input_dim=1, output_len=12,
        patch_len=3, stride=3, td_size=48, dw_size=7,
        d_td=8, d_dw=8, d_d=16, d_spa=8,
        if_time_in_day=True, if_day_in_week=True, if_spatial=True,
        num_layer=2,
    )

    key = jax.random.PRNGKey(0)
    k_param, k_val, k_tid, k_dow = jax.random.split(key, 4)
    params = init_params(k_param, cfg)

    B, L, N = 2, cfg["input_len"], cfg["node_size"]
    values = jax.random.normal(k_val, (B, L, N, 1), jnp.float32)
    tid = jax.random.uniform(k_tid, (B, L, N, 1), jnp.float32)          # time-in-day in [0,1)
    dow = jax.random.randint(k_dow, (B, L, N, 1), 0, 7).astype(jnp.float32)
    history_data = jnp.concatenate([values, tid, dow], axis=-1)         # [B, L, N, 3]

    fwd = jax.jit(functools.partial(multiscale_mlp_forward, cfg=cfg))
    out = jax.block_until_ready(fwd(params, history_data))
    assert out.shape == (B, cfg["output_len"], N, cfg["input_dim"])
    assert jnp.all(jnp.isfinite(out))
    print("KERNEL_OK")
</pallas_src>

<mosaic_0001>
module attributes {stable_mosaic.version = 11 : i64} {
  func.func @_fused_kernel(%arg0: memref<32x64xbf16, #tpu.memory_space<vmem>>, %arg1: memref<64x128xbf16, #tpu.memory_space<vmem>>, %arg2: memref<2x128x128xbf16, #tpu.memory_space<vmem>>, %arg3: memref<128x128xbf16, #tpu.memory_space<vmem>>, %arg4: memref<32x128xf32, #tpu.memory_space<vmem>>) attributes {dimension_semantics = [], scalar_prefetch = 0 : i64, scratch_operands = 0 : i64, tpu.core_type = #tpu.core_type<tc>} {
    %c0 = arith.constant 0 : index
    %c0_0 = arith.constant 0 : index
    %0 = vector.load %arg0[%c0, %c0_0] : memref<32x64xbf16, #tpu.memory_space<vmem>>, vector<32x64xbf16>
    %c0_1 = arith.constant 0 : index
    %c0_2 = arith.constant 0 : index
    %1 = vector.load %arg1[%c0_1, %c0_2] : memref<64x128xbf16, #tpu.memory_space<vmem>>, vector<64x128xbf16>
    %cst = arith.constant dense<0.000000e+00> : vector<32x128xf32>
    %2 = tpu.matmul %0, %1, %cst {dimension_numbers = #tpu.dot_dimension_numbers<[1], [0], [0], [1], [0, 0, 1, 1], [], []>} : vector<32x64xbf16>, vector<64x128xbf16>, vector<32x128xf32> -> vector<32x128xf32>
    %3 = tpu.iota {dimensions = array<i32: 1>} : vector<32x128xi32>
    %c80_i32 = arith.constant 80 : i32
    %4 = vector.broadcast %c80_i32 : i32 to vector<32x128xi32>
    %5 = arith.cmpi slt, %3, %4 : vector<32x128xi32>
    %cst_3 = arith.constant 0.000000e+00 : f32
    %6 = vector.broadcast %cst_3 : f32 to vector<32x128xf32>
    %7 = arith.maximumf %2, %6 : vector<32x128xf32>
    %8 = arith.select %5, %7, %2 : vector<32x128xi1>, vector<32x128xf32>
    %9 = arith.truncf %8 : vector<32x128xf32> to vector<32x128xbf16>
    %c0_4 = arith.constant 0 : index
    %c0_5 = arith.constant 0 : index
    %c0_6 = arith.constant 0 : index
    %10 = vector.load %arg2[%c0_4, %c0_5, %c0_6] : memref<2x128x128xbf16, #tpu.memory_space<vmem>>, vector<1x128x128xbf16>
    %11 = vector.shape_cast %10 : vector<1x128x128xbf16> to vector<128x128xbf16>
    %cst_7 = arith.constant dense<0.000000e+00> : vector<32x128xf32>
    %12 = tpu.matmul %9, %11, %cst_7 {dimension_numbers = #tpu.dot_dimension_numbers<[1], [0], [0], [1], [0, 0, 1, 1], [], []>} : vector<32x128xbf16>, vector<128x128xbf16>, vector<32x128xf32> -> vector<32x128xf32>
    %cst_8 = arith.constant 0.000000e+00 : f32
    %13 = vector.broadcast %cst_8 : f32 to vector<32x128xf32>
    %14 = arith.maximumf %12, %13 : vector<32x128xf32>
    %15 = arith.addf %8, %14 : vector<32x128xf32>
    %16 = arith.truncf %15 : vector<32x128xf32> to vector<32x128xbf16>
    %c1 = arith.constant 1 : index
    %c0_9 = arith.constant 0 : index
    %c0_10 = arith.constant 0 : index
    %17 = vector.load %arg2[%c1, %c0_9, %c0_10] : memref<2x128x128xbf16, #tpu.memory_space<vmem>>, vector<1x128x128xbf16>
    %18 = vector.shape_cast %17 : vector<1x128x128xbf16> to vector<128x128xbf16>
    %cst_11 = arith.constant dense<0.000000e+00> : vector<32x128xf32>
    %19 = tpu.matmul %16, %18, %cst_11 {dimension_numbers = #tpu.dot_dimension_numbers<[1], [0], [0], [1], [0, 0, 1, 1], [], []>} : vector<32x128xbf16>, vector<128x128xbf16>, vector<32x128xf32> -> vector<32x128xf32>
    %cst_12 = arith.constant 0.000000e+00 : f32
    %20 = vector.broadcast %cst_12 : f32 to vector<32x128xf32>
    %21 = arith.maximumf %19, %20 : vector<32x128xf32>
    %22 = arith.addf %15, %21 : vector<32x128xf32>
    %23 = arith.truncf %22 : vector<32x128xf32> to vector<32x128xbf16>
    %c0_13 = arith.constant 0 : index
    %c0_14 = arith.constant 0 : index
    %24 = vector.load %arg3[%c0_13, %c0_14] : memref<128x128xbf16, #tpu.memory_space<vmem>>, vector<128x128xbf16>
    %cst_15 = arith.constant dense<0.000000e+00> : vector<32x128xf32>
    %25 = tpu.matmul %23, %24, %cst_15 {dimension_numbers = #tpu.dot_dimension_numbers<[1], [0], [0], [1], [0, 0, 1, 1], [], []>} : vector<32x128xbf16>, vector<128x128xbf16>, vector<32x128xf32> -> vector<32x128xf32>
    %c0_16 = arith.constant 0 : index
    %c0_17 = arith.constant 0 : index
    %26 = vector.load %arg4[%c0_16, %c0_17] : memref<32x128xf32, #tpu.memory_space<vmem>>, vector<32x128xf32>
    tpu.vector_store %arg4[%c0_16, %c0_17], %25 {strides = array<i32>} : memref<32x128xf32, #tpu.memory_space<vmem>>, vector<32x128xf32>,
    return
  }
}

</mosaic_0001>

<llo_original>
// kernel: multiscale_mlp_forward.1
$region0: #{multiscale_mlp_forward.1}
  #allocation0 [shape = 'u32[]', space=smem, size = 0x4, offset = 0x4, fixed_abs, tag = 'smem constant byte address 0x4 - core index']
  #allocation1 [shape = 'u32[144,128]{1,0:T(1,128)}', space=vmem, size = 0x12000, scoped, tag = 'internal scratch']
  %s0 = inlined_call_operand.vmem [shape: bf16[32,64], index: 0, kind: input, shape index: {}]
  %s1 = inlined_call_operand.vmem [shape: bf16[64,128], index: 1, kind: input, shape index: {}]
  %s2 = inlined_call_operand.vmem [shape: bf16[2,128,128], index: 2, kind: input, shape index: {}]
  %s3 = inlined_call_operand.vmem [shape: bf16[128,128], index: 3, kind: input, shape index: {}]
  %s4 = inlined_call_operand.vmem [shape: f32[32,128], index: 4, kind: output, shape index: {}]
  %s5 = sld [smem:[#allocation0]]
  $region26: #{multiscale_mlp_forward.1} parent=0
    _
  %s7 = ssub.s32 1, %s5
  %s8 = scalar_select 0, %s7, %s5
  // Predicated region
  $region2: #{multiscale_mlp_forward.1} parent=0 // pred_check
    _
  $region3: #{multiscale_mlp_forward.1} parent=0 // pred_check_branch
    %10 = sbr.rel (0) target = $region5
  $region4: #{multiscale_mlp_forward.1} parent=0 // pred_region
    _
  $region5: #{multiscale_mlp_forward.1} parent=0 // pred_fallthru
    _
  // Predicated region
  $region6: #{multiscale_mlp_forward.1} parent=0 // pred_check
    _
  $region7: #{multiscale_mlp_forward.1} parent=0 // pred_check_branch
    %12 = sbr.rel (0) target = $region9
  $region8: #{multiscale_mlp_forward.1} parent=0 // pred_region
    _
  $region9: #{multiscale_mlp_forward.1} parent=0 // pred_fallthru
    _
  // Predicated region
  $region10: #{multiscale_mlp_forward.1} parent=0 // pred_check
    _
  $region11: #{multiscale_mlp_forward.1} parent=0 // pred_check_branch
    %14 = sbr.rel (0) target = $region13
  $region12: #{multiscale_mlp_forward.1} parent=0 // pred_region
    _
  $region13: #{multiscale_mlp_forward.1} parent=0 // pred_fallthru
    _
  // Predicated region
  $region14: #{multiscale_mlp_forward.1} parent=0 // pred_check
    _
  $region15: #{multiscale_mlp_forward.1} parent=0 // pred_check_branch
    %16 = sbr.rel (0) target = $region17
  $region16: #{multiscale_mlp_forward.1} parent=0 // pred_region
    _
  $region17: #{multiscale_mlp_forward.1} parent=0 // pred_fallthru
    _
  %v18 = vld [vmem:[%s0] sm:$0xf]
  %v19 = vld [vmem:[%s0 + $0x4] sm:$0xf]
  %v20 = vld [vmem:[%s0 + $0x8] sm:$0xf]
  %v21 = vld [vmem:[%s0 + $0xc] sm:$0xf]
  %v22 = vld [vmem:[%s1] sm:$0xf]
  %v23 = vld [vmem:[%s1 + $0x4] sm:$0xf]
  %v24 = vld [vmem:[%s1 + $0x8] sm:$0xf]
  %v25 = vld [vmem:[%s1 + $0xc] sm:$0xf]
  %v26 = vld [vmem:[%s1 + $0x10] sm:$0xf]
  %v27 = vld [vmem:[%s1 + $0x14] sm:$0xf]
  %v28 = vld [vmem:[%s1 + $0x18] sm:$0xf]
  %v29 = vld [vmem:[%s1 + $0x1c] sm:$0xf]
  %v34 = vunpack.c.l.b16 %v18
  %v35 = vunpack.c.l.b16 %v19
  %v36 = vunpack.c.l.b16 %v20
  %v37 = vunpack.c.l.b16 %v21
  %v38 = vpack.c.b16 %v35, %v34
  %v39 = vpack.c.b16 %v37, %v36
  %v48 = vunpack.c.l.b16 %v22
  %v49 = vunpack.c.l.b16 %v23
  %v50 = vunpack.c.l.b16 %v24
  %v51 = vunpack.c.l.b16 %v25
  %v52 = vunpack.c.l.b16 %v26
  %v53 = vunpack.c.l.b16 %v27
  %v54 = vunpack.c.l.b16 %v28
  %v55 = vunpack.c.l.b16 %v29
  %v56 = vpack.c.b16 %v49, %v48
  %v57 = vpack.c.b16 %v51, %v50
  %v58 = vpack.c.b16 %v53, %v52
  %v59 = vpack.c.b16 %v55, %v54
  %vm64 = vcmask 523264
  %v66 = vsel %vm64, %v38, 0
  %v69 = vsel %vm64, %v39, 0
  %71 = vmatprep.subr.bf16.mxu0 0
  %72 = vmatpush1.bf16.msra.mxu0 0
  %73 = vmatprep.subr.bf16.mxu0 0
  %74 = vmatpush1.bf16.msra.mxu0 0
  %75 = vmatprep.subr.bf16.mxu0 0
  %76 = vmatpush1.bf16.msra.mxu0 0
  %77 = vmatprep.subr.bf16.mxu0 0
  %78 = vmatpush1.bf16.msra.mxu0 0
  %79 = vmatprep.subr.bf16.mxu0 0
  %80 = vmatpush1.bf16.msra.mxu0 %v59
  %81 = vmatprep.subr.bf16.mxu0 0
  %82 = vmatpush1.bf16.msra.mxu0 %v58
  %83 = vmatprep.subr.bf16.mxu0 0
  %84 = vmatpush1.bf16.msra.mxu0 %v57
  %85 = vmatprep.subr.bf16.mxu0 0
  %86 = vmatpush1.bf16.msra.mxu0 %v56
  %87 = vmatprep.subr.bf16.mxu0 0
  %88 = vmatpush2.bf16.msra.mxu0 0
  %89 = vmatprep.subr.bf16.mxu0 0
  %90 = vmatpush2.bf16.msra.mxu0 0
  %91 = vmatprep.subr.bf16.mxu0 0
  %92 = vmatpush2.bf16.msra.mxu0 0
  %93 = vmatprep.subr.bf16.mxu0 0
  %94 = vmatpush2.bf16.msra.mxu0 0
  %95 = vmatprep.subr.bf16.mxu0 0
  %96 = vmatpush2.bf16.msra.mxu0 0
  %97 = vmatprep.subr.bf16.mxu0 0
  %98 = vmatpush2.bf16.msra.mxu0 0
  %99 = vmatprep.subr.bf16.mxu0 0
  %100 = vmatpush2.bf16.msra.mxu0 0
  %101 = vmatprep.subr.bf16.mxu0 0
  %102 = vmatpush2.bf16.msra.mxu0 0
  %103 = vmatprep.mubr.bf16.mxu0 0
  %104 = vmatmul.mubr.bf16.gmra.mxu0 %v66
  %v105 = vpop.f32.mrf.mxu0
  %v106 = vadd.f32 0.0, %v105
  %v107 = vpop.f32.mrf.mxu0
  %v108 = vpop.f32.mrf.mxu0
  %v109 = vadd.f32 0.0, %v108
  %v110 = vpop.f32.mrf.mxu0
  %111 = vmatprep.mubr.bf16.mxu0 0
  %112 = vmatmul.mubr.bf16.gmra.mxu0 %v69
  %v113 = vpop.f32.mrf.mxu0
  %v114 = vadd.f32 0.0, %v113
  %v115 = vpop.f32.mrf.mxu0
  %v116 = vpop.f32.mrf.mxu0
  %v117 = vadd.f32 0.0, %v116
  %v118 = vpop.f32.mrf.mxu0
  %119 = vdwg.mxu0
  %v120 = vlaneseq
  %v121 = vand.u32 %v120, 127
  %vm122 = vcmp.lt.s32.totalorder %v121, 80
  %v123 = vmax.f32 %v106, 0.0
  %v124 = vmax.f32 %v109, 0.0
  %v125 = vmax.f32 %v114, 0.0
  %v126 = vmax.f32 %v117, 0.0
  %v127 = vsel %vm122, %v123, %v106
  %v128 = vsel %vm122, %v124, %v109
  %v129 = vsel %vm122, %v125, %v114
  %v130 = vsel %vm122, %v126, %v117
  %v131 = vpack.c.bf16 %v128, %v127
  %v132 = vpack.c.bf16 %v130, %v129
  %v133 = vld [vmem:[%s2] sm:$0xf]
  %v134 = vld [vmem:[%s2 + $0x4] sm:$0xf]
  %v135 = vld [vmem:[%s2 + $0x8] sm:$0xf]
  %v136 = vld [vmem:[%s2 + $0xc] sm:$0xf]
  %v137 = vld [vmem:[%s2 + $0x10] sm:$0xf]
  %v138 = vld [vmem:[%s2 + $0x14] sm:$0xf]
  %v139 = vld [vmem:[%s2 + $0x18] sm:$0xf]
  %v140 = vld [vmem:[%s2 + $0x1c] sm:$0xf]
  %v141 = vld [vmem:[%s2 + $0x20] sm:$0xf]
  %v142 = vld [vmem:[%s2 + $0x24] sm:$0xf]
  %v143 = vld [vmem:[%s2 + $0x28] sm:$0xf]
  %v144 = vld [vmem:[%s2 + $0x2c] sm:$0xf]
  %v145 = vld [vmem:[%s2 + $0x30] sm:$0xf]
  %v146 = vld [vmem:[%s2 + $0x34] sm:$0xf]
  %v147 = vld [vmem:[%s2 + $0x38] sm:$0xf]
  %v148 = vld [vmem:[%s2 + $0x3c] sm:$0xf]
  %v165 = vunpack.c.l.b16 %v133
  %v166 = vunpack.c.l.b16 %v134
  %v167 = vunpack.c.l.b16 %v135
  %v168 = vunpack.c.l.b16 %v136
  %v169 = vunpack.c.l.b16 %v137
  %v170 = vunpack.c.l.b16 %v138
  %v171 = vunpack.c.l.b16 %v139
  %v172 = vunpack.c.l.b16 %v140
  %v173 = vunpack.c.l.b16 %v141
  %v174 = vunpack.c.l.b16 %v142
  %v175 = vunpack.c.l.b16 %v143
  %v176 = vunpack.c.l.b16 %v144
  %v177 = vunpack.c.l.b16 %v145
  %v178 = vunpack.c.l.b16 %v146
  %v179 = vunpack.c.l.b16 %v147
  %v180 = vunpack.c.l.b16 %v148
  %v181 = vpack.c.b16 %v166, %v165
  %v182 = vpack.c.b16 %v168, %v167
  %v183 = vpack.c.b16 %v170, %v169
  %v184 = vpack.c.b16 %v172, %v171
  %v185 = vpack.c.b16 %v174, %v173
  %v186 = vpack.c.b16 %v176, %v175
  %v187 = vpack.c.b16 %v178, %v177
  %v188 = vpack.c.b16 %v180, %v179
  %197 = vmatprep.subr.bf16.mxu0 0
  %198 = vmatpush1.bf16.msra.mxu0 %v188
  %199 = vmatprep.subr.bf16.mxu0 0
  %200 = vmatpush1.bf16.msra.mxu0 %v187
  %201 = vmatprep.subr.bf16.mxu0 0
  %202 = vmatpush1.bf16.msra.mxu0 %v186
  %203 = vmatprep.subr.bf16.mxu0 0
  %204 = vmatpush1.bf16.msra.mxu0 %v185
  %205 = vmatprep.subr.bf16.mxu0 0
  %206 = vmatpush1.bf16.msra.mxu0 %v184
  %207 = vmatprep.subr.bf16.mxu0 0
  %208 = vmatpush1.bf16.msra.mxu0 %v183
  %209 = vmatprep.subr.bf16.mxu0 0
  %210 = vmatpush1.bf16.msra.mxu0 %v182
  %211 = vmatprep.subr.bf16.mxu0 0
  %212 = vmatpush1.bf16.msra.mxu0 %v181
  %213 = vmatprep.subr.bf16.mxu0 0
  %214 = vmatpush2.bf16.msra.mxu0 0
  %215 = vmatprep.subr.bf16.mxu0 0
  %216 = vmatpush2.bf16.msra.mxu0 0
  %217 = vmatprep.subr.bf16.mxu0 0
  %218 = vmatpush2.bf16.msra.mxu0 0
  %219 = vmatprep.subr.bf16.mxu0 0
  %220 = vmatpush2.bf16.msra.mxu0 0
  %221 = vmatprep.subr.bf16.mxu0 0
  %222 = vmatpush2.bf16.msra.mxu0 0
  %223 = vmatprep.subr.bf16.mxu0 0
  %224 = vmatpush2.bf16.msra.mxu0 0
  %225 = vmatprep.subr.bf16.mxu0 0
  %226 = vmatpush2.bf16.msra.mxu0 0
  %227 = vmatprep.subr.bf16.mxu0 0
  %228 = vmatpush2.bf16.msra.mxu0 0
  %229 = vmatprep.mubr.bf16.mxu0 0
  %230 = vmatmul.mubr.bf16.gmra.mxu0 %v131
  %v231 = vpop.f32.mrf.mxu0
  %v232 = vadd.f32 0.0, %v231
  %v233 = vpop.f32.mrf.mxu0
  %v234 = vpop.f32.mrf.mxu0
  %v235 = vadd.f32 0.0, %v234
  %v236 = vpop.f32.mrf.mxu0
  %237 = vmatprep.mubr.bf16.mxu0 0
  %238 = vmatmul.mubr.bf16.gmra.mxu0 %v132
  %v239 = vpop.f32.mrf.mxu0
  %v240 = vadd.f32 0.0, %v239
  %v241 = vpop.f32.mrf.mxu0
  %v242 = vpop.f32.mrf.mxu0
  %v243 = vadd.f32 0.0, %v242
  %v244 = vpop.f32.mrf.mxu0
  %245 = vdwg.mxu0
  %v246 = vmax.f32 %v232, 0.0
  %v247 = vmax.f32 %v235, 0.0
  %v248 = vmax.f32 %v240, 0.0
  %v249 = vmax.f32 %v243, 0.0
  %v250 = vadd.f32 %v127, %v246
  %v251 = vadd.f32 %v128, %v247
  %v252 = vadd.f32 %v129, %v248
  %v253 = vadd.f32 %v130, %v249
  %v254 = vpack.c.bf16 %v251, %v250
  %v255 = vpack.c.bf16 %v253, %v252
  %s256 = scalar_lea.vmem %s2, 64
  %v257 = vld [vmem:[%s256] sm:$0xf]
  %v258 = vld [vmem:[%s256 + $0x4] sm:$0xf]
  %v259 = vld [vmem:[%s256 + $0x8] sm:$0xf]
  %v260 = vld [vmem:[%s256 + $0xc] sm:$0xf]
  %v261 = vld [vmem:[%s256 + $0x10] sm:$0xf]
  %v262 = vld [vmem:[%s256 + $0x14] sm:$0xf]
  %v263 = vld [vmem:[%s256 + $0x18] sm:$0xf]
  %v264 = vld [vmem:[%s256 + $0x1c] sm:$0xf]
  %v265 = vld [vmem:[%s256 + $0x20] sm:$0xf]
  %v266 = vld [vmem:[%s256 + $0x24] sm:$0xf]
  %v267 = vld [vmem:[%s256 + $0x28] sm:$0xf]
  %v268 = vld [vmem:[%s256 + $0x2c] sm:$0xf]
  %v269 = vld [vmem:[%s256 + $0x30] sm:$0xf]
  %v270 = vld [vmem:[%s256 + $0x34] sm:$0xf]
  %v271 = vld [vmem:[%s256 + $0x38] sm:$0xf]
  %v272 = vld [vmem:[%s256 + $0x3c] sm:$0xf]
  %v289 = vunpack.c.l.b16 %v257
  %v290 = vunpack.c.l.b16 %v258
  %v291 = vunpack.c.l.b16 %v259
  %v292 = vunpack.c.l.b16 %v260
  %v293 = vunpack.c.l.b16 %v261
  %v294 = vunpack.c.l.b16 %v262
  %v295 = vunpack.c.l.b16 %v263
  %v296 = vunpack.c.l.b16 %v264
  %v297 = vunpack.c.l.b16 %v265
  %v298 = vunpack.c.l.b16 %v266
  %v299 = vunpack.c.l.b16 %v267
  %v300 = vunpack.c.l.b16 %v268
  %v301 = vunpack.c.l.b16 %v269
  %v302 = vunpack.c.l.b16 %v270
  %v303 = vunpack.c.l.b16 %v271
  %v304 = vunpack.c.l.b16 %v272
  %v305 = vpack.c.b16 %v290, %v289
  %v306 = vpack.c.b16 %v292, %v291
  %v307 = vpack.c.b16 %v294, %v293
  %v308 = vpack.c.b16 %v296, %v295
  %v309 = vpack.c.b16 %v298, %v297
  %v310 = vpack.c.b16 %v300, %v299
  %v311 = vpack.c.b16 %v302, %v301
  %v312 = vpack.c.b16 %v304, %v303
  %321 = vmatprep.subr.bf16.mxu0 0
  %322 = vmatpush1.bf16.msra.mxu0 %v312
  %323 = vmatprep.subr.bf16.mxu0 0
  %324 = vmatpush1.bf16.msra.mxu0 %v311
  %325 = vmatprep.subr.bf16.mxu0 0
  %326 = vmatpush1.bf16.msra.mxu0 %v310
  %327 = vmatprep.subr.bf16.mxu0 0
  %328 = vmatpush1.bf16.msra.mxu0 %v309
  %329 = vmatprep.subr.bf16.mxu0 0
  %330 = vmatpush1.bf16.msra.mxu0 %v308
  %331 = vmatprep.subr.bf16.mxu0 0
  %332 = vmatpush1.bf16.msra.mxu0 %v307
  %333 = vmatprep.subr.bf16.mxu0 0
  %334 = vmatpush1.bf16.msra.mxu0 %v306
  %335 = vmatprep.subr.bf16.mxu0 0
  %336 = vmatpush1.bf16.msra.mxu0 %v305
  %337 = vmatprep.subr.bf16.mxu0 0
  %338 = vmatpush2.bf16.msra.mxu0 0
  %339 = vmatprep.subr.bf16.mxu0 0
  %340 = vmatpush2.bf16.msra.mxu0 0
  %341 = vmatprep.subr.bf16.mxu0 0
  %342 = vmatpush2.bf16.msra.mxu0 0
  %343 = vmatprep.subr.bf16.mxu0 0
  %344 = vmatpush2.bf16.msra.mxu0 0
  %345 = vmatprep.subr.bf16.mxu0 0
  %346 = vmatpush2.bf16.msra.mxu0 0
  %347 = vmatprep.subr.bf16.mxu0 0
  %348 = vmatpush2.bf16.msra.mxu0 0
  %349 = vmatprep.subr.bf16.mxu0 0
  %350 = vmatpush2.bf16.msra.mxu0 0
  %351 = vmatprep.subr.bf16.mxu0 0
  %352 = vmatpush2.bf16.msra.mxu0 0
  %353 = vmatprep.mubr.bf16.mxu0 0
  %354 = vmatmul.mubr.bf16.gmra.mxu0 %v254
  %v355 = vpop.f32.mrf.mxu0
  %v356 = vadd.f32 0.0, %v355
  %v357 = vpop.f32.mrf.mxu0
  %v358 = vpop.f32.mrf.mxu0
  %v359 = vadd.f32 0.0, %v358
  %v360 = vpop.f32.mrf.mxu0
  %361 = vmatprep.mubr.bf16.mxu0 0
  %362 = vmatmul.mubr.bf16.gmra.mxu0 %v255
  %v363 = vpop.f32.mrf.mxu0
  %v364 = vadd.f32 0.0, %v363
  %v365 = vpop.f32.mrf.mxu0
  %v366 = vpop.f32.mrf.mxu0
  %v367 = vadd.f32 0.0, %v366
  %v368 = vpop.f32.mrf.mxu0
  %369 = vdwg.mxu0
  %v370 = vmax.f32 %v356, 0.0
  %v371 = vmax.f32 %v359, 0.0
  %v372 = vmax.f32 %v364, 0.0
  %v373 = vmax.f32 %v367, 0.0
  %v374 = vadd.f32 %v250, %v370
  %v375 = vadd.f32 %v251, %v371
  %v376 = vadd.f32 %v252, %v372
  %v377 = vadd.f32 %v253, %v373
  %v378 = vpack.c.bf16 %v375, %v374
  %v379 = vpack.c.bf16 %v377, %v376
  %v380 = vld [vmem:[%s3] sm:$0xf]
  %v381 = vld [vmem:[%s3 + $0x4] sm:$0xf]
  %v382 = vld [vmem:[%s3 + $0x8] sm:$0xf]
  %v383 = vld [vmem:[%s3 + $0xc] sm:$0xf]
  %v384 = vld [vmem:[%s3 + $0x10] sm:$0xf]
  %v385 = vld [vmem:[%s3 + $0x14] sm:$0xf]
  %v386 = vld [vmem:[%s3 + $0x18] sm:$0xf]
  %v387 = vld [vmem:[%s3 + $0x1c] sm:$0xf]
  %v388 = vld [vmem:[%s3 + $0x20] sm:$0xf]
  %v389 = vld [vmem:[%s3 + $0x24] sm:$0xf]
  %v390 = vld [vmem:[%s3 + $0x28] sm:$0xf]
  %v391 = vld [vmem:[%s3 + $0x2c] sm:$0xf]
  %v392 = vld [vmem:[%s3 + $0x30] sm:$0xf]
  %v393 = vld [vmem:[%s3 + $0x34] sm:$0xf]
  %v394 = vld [vmem:[%s3 + $0x38] sm:$0xf]
  %v395 = vld [vmem:[%s3 + $0x3c] sm:$0xf]
  %v412 = vunpack.c.l.b16 %v380
  %v413 = vunpack.c.l.b16 %v381
  %v414 = vunpack.c.l.b16 %v382
  %v415 = vunpack.c.l.b16 %v383
  %v416 = vunpack.c.l.b16 %v384
  %v417 = vunpack.c.l.b16 %v385
  %v418 = vunpack.c.l.b16 %v386
  %v419 = vunpack.c.l.b16 %v387
  %v420 = vunpack.c.l.b16 %v388
  %v421 = vunpack.c.l.b16 %v389
  %v422 = vunpack.c.l.b16 %v390
  %v423 = vunpack.c.l.b16 %v391
  %v424 = vunpack.c.l.b16 %v392
  %v425 = vunpack.c.l.b16 %v393
  %v426 = vunpack.c.l.b16 %v394
  %v427 = vunpack.c.l.b16 %v395
  %v428 = vpack.c.b16 %v413, %v412
  %v429 = vpack.c.b16 %v415, %v414
  %v430 = vpack.c.b16 %v417, %v416
  %v431 = vpack.c.b16 %v419, %v418
  %v432 = vpack.c.b16 %v421, %v420
  %v433 = vpack.c.b16 %v423, %v422
  %v434 = vpack.c.b16 %v425, %v424
  %v435 = vpack.c.b16 %v427, %v426
  %444 = vmatprep.subr.bf16.mxu0 0
  %445 = vmatpush1.bf16.msra.mxu0 %v435
  %446 = vmatprep.subr.bf16.mxu0 0
  %447 = vmatpush1.bf16.msra.mxu0 %v434
  %448 = vmatprep.subr.bf16.mxu0 0
  %449 = vmatpush1.bf16.msra.mxu0 %v433
  %450 = vmatprep.subr.bf16.mxu0 0
  %451 = vmatpush1.bf16.msra.mxu0 %v432
  %452 = vmatprep.subr.bf16.mxu0 0
  %453 = vmatpush1.bf16.msra.mxu0 %v431
  %454 = vmatprep.subr.bf16.mxu0 0
  %455 = vmatpush1.bf16.msra.mxu0 %v430
  %456 = vmatprep.subr.bf16.mxu0 0
  %457 = vmatpush1.bf16.msra.mxu0 %v429
  %458 = vmatprep.subr.bf16.mxu0 0
  %459 = vmatpush1.bf16.msra.mxu0 %v428
  %460 = vmatprep.subr.bf16.mxu0 0
  %461 = vmatpush2.bf16.msra.mxu0 0
  %462 = vmatprep.subr.bf16.mxu0 0
  %463 = vmatpush2.bf16.msra.mxu0 0
  %464 = vmatprep.subr.bf16.mxu0 0
  %465 = vmatpush2.bf16.msra.mxu0 0
  %466 = vmatprep.subr.bf16.mxu0 0
  %467 = vmatpush2.bf16.msra.mxu0 0
  %468 = vmatprep.subr.bf16.mxu0 0
  %469 = vmatpush2.bf16.msra.mxu0 0
  %470 = vmatprep.subr.bf16.mxu0 0
  %471 = vmatpush2.bf16.msra.mxu0 0
  %472 = vmatprep.subr.bf16.mxu0 0
  %473 = vmatpush2.bf16.msra.mxu0 0
  %474 = vmatprep.subr.bf16.mxu0 0
  %475 = vmatpush2.bf16.msra.mxu0 0
  %476 = vmatprep.mubr.bf16.mxu0 0
  %477 = vmatmul.mubr.bf16.gmra.mxu0 %v378
  %v478 = vpop.f32.mrf.mxu0
  %v479 = vadd.f32 0.0, %v478
  %v480 = vpop.f32.mrf.mxu0
  %v481 = vpop.f32.mrf.mxu0
  %v482 = vadd.f32 0.0, %v481
  %v483 = vpop.f32.mrf.mxu0
  %484 = vmatprep.mubr.bf16.mxu0 0
  %485 = vmatmul.mubr.bf16.gmra.mxu0 %v379
  %v486 = vpop.f32.mrf.mxu0
  %v487 = vadd.f32 0.0, %v486
  %v488 = vpop.f32.mrf.mxu0
  %v489 = vpop.f32.mrf.mxu0
  %v490 = vadd.f32 0.0, %v489
  %v491 = vpop.f32.mrf.mxu0
  %492 = vdwg.mxu0
  %493 = vst [vmem:[%s4] sm:$0xff] %v479
  %494 = vst [vmem:[%s4 + $0x8] sm:$0xff] %v482
  %495 = vst [vmem:[%s4 + $0x10] sm:$0xff] %v487
  %496 = vst [vmem:[%s4 + $0x18] sm:$0xff] %v490
  // Predicated region
  $region18: #{multiscale_mlp_forward.1} parent=0 // pred_check
    _
  $region19: #{multiscale_mlp_forward.1} parent=0 // pred_check_branch
    %498 = sbr.rel (0) target = $region21
  $region20: #{multiscale_mlp_forward.1} parent=0 // pred_region
    _
  $region21: #{multiscale_mlp_forward.1} parent=0 // pred_fallthru
    _
  // Predicated region
  $region22: #{multiscale_mlp_forward.1} parent=0 // pred_check
    _
  $region23: #{multiscale_mlp_forward.1} parent=0 // pred_check_branch
    %500 = sbr.rel (0) target = $region25
  $region24: #{multiscale_mlp_forward.1} parent=0 // pred_region
    _
  $region25: #{multiscale_mlp_forward.1} parent=0 // pred_fallthru
    _

</llo_original>
